<compile_context>
chip_gen: v5e
topology: v5e:2x2
jax: 0.10.0
libtpu: 0.0.40
codegen_flags: <defaults>
</compile_context>

<pallas_src>
import jax
import jax.numpy as jnp
from jax.experimental import pallas as pl
from jax.experimental.pallas import tpu as pltpu

NUM_ERA = 10          # len(StropheParams.YEAR) — matches the CE weight tensor
LANES = 128           # TPU lane width; all packed slabs are lane-dense

# Lane layout inside the packed slabs.
VAL_LANE = 0          # year_val head column / year target / year_val output
ERA_OFF = 1           # era head columns / one-hot bucket / era probs: lanes 1..10
L1_LANE = 16          # per-sample |year_val - year| in the output slab
CE_LANE = 17          # per-sample weighted CE in the output slab


def year_validator_kernel(x_ref, w_ref, c_ref, t_ref, out_ref):
    # x_ref: (Bt, SEQ_BLK, H) — only the leading sublane tile of each sequence;
    # token 0 of each row is the CLS token.
    bt = out_ref.shape[0]
    cls = x_ref[:, 0, :]                                               # (Bt, H) f32

    bias = c_ref[0:1, :]                                               # (1, LANES)
    cw = c_ref[1:2, :]                                                 # (1, LANES) CE weights on era lanes
    targets = t_ref[...]                                               # (Bt, LANES)

    # ---- fused heads: one MXU matmul covers Linear(H,1) and Linear(H,NUM_ERA) ----
    z = jnp.dot(cls, w_ref[...], preferred_element_type=jnp.float32) + bias   # (Bt, LANES)

    lane = jax.lax.broadcasted_iota(jnp.int32, (bt, LANES), 1)
    is_val = lane == VAL_LANE
    is_era = jnp.logical_and(lane >= ERA_OFF, lane < ERA_OFF + NUM_ERA)
    neg_inf = jnp.float32(-jnp.inf)

    # ---- softmax(year_era) over the era lanes only (others masked to -inf -> 0) ----
    era_logits = jnp.where(is_era, z, neg_inf)
    m1 = jnp.max(era_logits, axis=-1, keepdims=True)
    e1 = jnp.exp(era_logits - m1)
    probs = e1 / jnp.sum(e1, axis=-1, keepdims=True)                   # (Bt, LANES), 0 off era lanes

    # ---- L1Loss: per-sample |year_val - year| (batch mean taken in the wrapper) ----
    l1_i = jnp.sum(jnp.where(is_val, jnp.abs(z - targets), 0.0),
                   axis=-1, keepdims=True)                             # (Bt, 1)

    # ---- CrossEntropyLoss(weight=cw) on the *already-softmaxed* probabilities with
    # probability (one-hot) targets — faithful to the PyTorch module, which feeds the
    # softmax output into nn.CrossEntropyLoss (double softmax). Probability targets
    # reduce with a plain batch mean (done in the wrapper).
    p_masked = jnp.where(is_era, probs, neg_inf)
    m2 = jnp.max(p_masked, axis=-1, keepdims=True)
    lse = m2 + jnp.log(jnp.sum(jnp.exp(p_masked - m2), axis=-1, keepdims=True))
    log_sm = probs - lse                                               # valid on era lanes (cw=0 elsewhere)
    ce_i = -jnp.sum(cw * targets * log_sm, axis=-1, keepdims=True)     # (Bt, 1)

    # ---- single unmasked lane-dense store of the whole output slab ----
    slab = (jnp.where(is_val, z, probs)
            + jnp.where(lane == L1_LANE, l1_i, 0.0)
            + jnp.where(lane == CE_LANE, ce_i, 0.0))
    out_ref[...] = slab


def _pack_params(w_val, b_val, w_era, b_era, class_weight):
    """Pack both heads + biases + CE class weights into lane-dense slabs.

    In a real training loop this packing is done once (folded into the checkpoint),
    not per forward call.
    """
    H = w_val.shape[0]
    w = jnp.zeros((H, LANES), jnp.float32)
    w = w.at[:, VAL_LANE:VAL_LANE + 1].set(w_val.astype(jnp.float32))
    w = w.at[:, ERA_OFF:ERA_OFF + NUM_ERA].set(w_era.astype(jnp.float32))

    c = jnp.zeros((2, LANES), jnp.float32)
    c = c.at[0, VAL_LANE].set(b_val.astype(jnp.float32)[0])
    c = c.at[0, ERA_OFF:ERA_OFF + NUM_ERA].set(b_era.astype(jnp.float32))
    c = c.at[1, ERA_OFF:ERA_OFF + NUM_ERA].set(class_weight.astype(jnp.float32))
    return w, c


def _pack_targets(year, year_bucket):
    B = year.shape[0]
    t = jnp.zeros((B, LANES), jnp.float32)
    t = t.at[:, VAL_LANE:VAL_LANE + 1].set(year.astype(jnp.float32))
    t = t.at[:, ERA_OFF:ERA_OFF + NUM_ERA].set(year_bucket.astype(jnp.float32))
    return t


@jax.jit
def year_validator_forward(last_hidden, w_val, b_val, w_era, b_era,
                           year, year_bucket, class_weight):
    """last_hidden: (B, S, H) f32; year: (B,1); year_bucket: (B, NUM_ERA) one-hot f32."""
    B, S, H = last_hidden.shape

    w_packed, consts = _pack_params(w_val, b_val, w_era, b_era, class_weight)
    targets = _pack_targets(year, year_bucket)

    # Batch tile: sublane-aligned multiple of 8 when it divides B, else the full
    # batch in one block (keeps every block exact — no padded rows in the loss mean).
    b_tile = 8 if (B % 8 == 0) else B
    # Only the leading sublane tile of each sequence is DMA'd (CLS lives at row 0).
    seq_blk = S if S < 8 else 8

    grid = (B // b_tile,)

    out = pl.pallas_call(
        year_validator_kernel,
        out_shape=jax.ShapeDtypeStruct((B, LANES), jnp.float32),
        grid=grid,
        in_specs=[
            pl.BlockSpec((b_tile, seq_blk, H), lambda i: (i, 0, 0)),   # last_hidden (CLS tile)
            pl.BlockSpec((H, LANES), lambda i: (0, 0)),                # fused head weight
            pl.BlockSpec((2, LANES), lambda i: (0, 0)),                # biases + CE class weights
            pl.BlockSpec((b_tile, LANES), lambda i: (i, 0)),           # packed targets
        ],
        out_specs=pl.BlockSpec((b_tile, LANES), lambda i: (i, 0)),
        compiler_params=pltpu.CompilerParams(
            dimension_semantics=("parallel",)),                        # batch axis shards across TCs (v7x)
    )(last_hidden, w_packed, consts, targets)

    year_val = out[:, VAL_LANE:VAL_LANE + 1]                           # (B, 1)
    year_era = out[:, ERA_OFF:ERA_OFF + NUM_ERA]                       # (B, NUM_ERA)
    # Batch-mean of the per-sample loss lanes (kept out of the kernel so the batch
    # grid axis stays "parallel"; two trivial reductions).
    loss = jnp.mean(out[:, L1_LANE]) + jnp.mean(out[:, CE_LANE])
    # TODO(synk): the pretrained MLM backbone's outputs.loss has no Pallas equivalent
    # here (no checkpoint); it is omitted from `loss`.
    return year_val, year_era, loss


if __name__ == "__main__":
    # Small shapes consistent with the module's forward.
    B, S, H = 2, 8, 32

    key = jax.random.PRNGKey(0)
    k_hidden, k_wv, k_bv, k_we, k_be, k_year = jax.random.split(key, 6)

    # Stand-in for the backbone's last hidden state (B, S, H).
    last_hidden = jax.random.normal(k_hidden, (B, S, H), dtype=jnp.float32)

    # Head parameters (shapes match torch.nn.Linear(H,1) / Linear(H,10)).
    w_val = jax.random.normal(k_wv, (H, 1), dtype=jnp.float32) * 0.02
    b_val = jax.random.normal(k_bv, (1,), dtype=jnp.float32) * 0.02
    w_era = jax.random.normal(k_we, (H, NUM_ERA), dtype=jnp.float32) * 0.02
    b_era = jax.random.normal(k_be, (NUM_ERA,), dtype=jnp.float32) * 0.02

    # Targets: regression year value (B,1) and one-hot era bucket (B, NUM_ERA).
    year = jax.random.normal(k_year, (B, 1), dtype=jnp.float32)
    bucket_idx = jnp.array([3, 7], dtype=jnp.int32)
    year_bucket = jax.nn.one_hot(bucket_idx, NUM_ERA, dtype=jnp.float32)

    # CrossEntropyLoss class weights from the module's __init__.
    class_weight = jnp.array(
        [2.5, 1.75, 1.25, 1.25, 1.0, 1.0, 1.25, 1.5, 1.75, 0.0], dtype=jnp.float32)

    year_val, year_era, loss = year_validator_forward(
        last_hidden, w_val, b_val, w_era, b_era, year, year_bucket, class_weight)
    jax.block_until_ready((year_val, year_era, loss))

    # Pure-JAX reference (same semantics: heads on CLS, L1 + weighted CE on softmax probs).
    cls = last_hidden[:, 0, :]
    yv_ref = cls @ w_val + b_val
    probs_ref = jax.nn.softmax(cls @ w_era + b_era, axis=-1)
    l1_ref = jnp.mean(jnp.abs(yv_ref - year))
    logsm_ref = jax.nn.log_softmax(probs_ref, axis=-1)
    ce_ref = jnp.mean(-jnp.sum(class_weight * year_bucket * logsm_ref, axis=-1))
    loss_ref = l1_ref + ce_ref

    assert year_val.shape == (B, 1)
    assert year_era.shape == (B, NUM_ERA)
    assert bool(jnp.isfinite(loss))
    assert bool(jnp.allclose(year_val, yv_ref, atol=1e-2, rtol=1e-2))
    assert bool(jnp.allclose(year_era, probs_ref, atol=1e-2, rtol=1e-2))
    assert bool(jnp.allclose(loss, loss_ref, atol=1e-2, rtol=1e-2))

    print("KERNEL_OK")
</pallas_src>

<mosaic_0001>
module attributes {stable_mosaic.version = 11 : i64} {
  func.func @year_validator_kernel(%arg0: i32, %arg1: memref<2x8x32xf32, #tpu.memory_space<vmem>>, %arg2: memref<32x128xf32, #tpu.memory_space<vmem>>, %arg3: memref<2x128xf32, #tpu.memory_space<vmem>>, %arg4: memref<2x128xf32, #tpu.memory_space<vmem>>, %arg5: memref<2x128xf32, #tpu.memory_space<vmem>>) attributes {dimension_semantics = [#tpu.dimension_semantics<parallel>], iteration_bounds = array<i64: 1>, scalar_prefetch = 0 : i64, scratch_operands = 0 : i64, tpu.core_type = #tpu.core_type<tc>, window_params = [{transform_indices = @transform_0, window_bounds = array<i64: 2, 8, 32>}, {pipeline_mode = #tpu.pipeline_mode<synchronous>, transform_indices = @transform_1, window_bounds = array<i64: 32, 128>}, {pipeline_mode = #tpu.pipeline_mode<synchronous>, transform_indices = @transform_2, window_bounds = array<i64: 2, 128>}, {transform_indices = @transform_3, window_bounds = array<i64: 2, 128>}, {transform_indices = @transform_4, window_bounds = array<i64: 2, 128>}]} {
    %c0 = arith.constant 0 : index
    %c0_0 = arith.constant 0 : index
    %c0_1 = arith.constant 0 : index
    %0 = vector.load %arg1[%c0, %c0_0, %c0_1] : memref<2x8x32xf32, #tpu.memory_space<vmem>>, vector<2x1x32xf32>
    %1 = vector.shape_cast %0 : vector<2x1x32xf32> to vector<2x32xf32>
    %c0_2 = arith.constant 0 : index
    %c0_3 = arith.constant 0 : index
    %2 = vector.load %arg3[%c0_2, %c0_3] : memref<2x128xf32, #tpu.memory_space<vmem>>, vector<1x128xf32>
    %c1 = arith.constant 1 : index
    %c0_4 = arith.constant 0 : index
    %3 = vector.load %arg3[%c1, %c0_4] : memref<2x128xf32, #tpu.memory_space<vmem>>, vector<1x128xf32>
    %c0_5 = arith.constant 0 : index
    %c0_6 = arith.constant 0 : index
    %4 = vector.load %arg4[%c0_5, %c0_6] : memref<2x128xf32, #tpu.memory_space<vmem>>, vector<2x128xf32>
    %c0_7 = arith.constant 0 : index
    %c0_8 = arith.constant 0 : index
    %5 = vector.load %arg2[%c0_7, %c0_8] : memref<32x128xf32, #tpu.memory_space<vmem>>, vector<32x128xf32>
    %cst = arith.constant dense<0.000000e+00> : vector<2x128xf32>
    %6 = tpu.matmul %1, %5, %cst {dimension_numbers = #tpu.dot_dimension_numbers<[1], [0], [0], [1], [0, 0, 1, 1], [], []>} : vector<2x32xf32>, vector<32x128xf32>, vector<2x128xf32> -> vector<2x128xf32>
    %7 = vector.broadcast %2 : vector<1x128xf32> to vector<2x128xf32>
    %8 = arith.addf %6, %7 : vector<2x128xf32>
    %9 = tpu.iota {dimensions = array<i32: 1>} : vector<2x128xi32>
    %c0_i32 = arith.constant 0 : i32
    %10 = vector.broadcast %c0_i32 : i32 to vector<2x128xi32>
    %11 = arith.cmpi eq, %9, %10 : vector<2x128xi32>
    %c1_i32 = arith.constant 1 : i32
    %12 = vector.broadcast %c1_i32 : i32 to vector<2x128xi32>
    %13 = arith.cmpi sge, %9, %12 : vector<2x128xi32>
    %c11_i32 = arith.constant 11 : i32
    %14 = vector.broadcast %c11_i32 : i32 to vector<2x128xi32>
    %15 = arith.cmpi slt, %9, %14 : vector<2x128xi32>
    %16 = arith.andi %13, %15 : vector<2x128xi1>
    %cst_9 = arith.constant 0xFF800000 : f32
    %17 = vector.broadcast %cst_9 : f32 to vector<2x128xf32>
    %18 = arith.select %16, %8, %17 : vector<2x128xi1>, vector<2x128xf32>
    %cst_10 = arith.constant dense<0xFF800000> : vector<2xf32>
    %19 = vector.multi_reduction <maximumf>, %18, %cst_10 [1] : vector<2x128xf32> to vector<2xf32>
    %20 = vector.shape_cast %19 : vector<2xf32> to vector<2x1xf32>
    %21 = vector.broadcast %20 : vector<2x1xf32> to vector<2x128xf32>
    %22 = arith.subf %18, %21 : vector<2x128xf32>
    %23 = math.exp %22 : vector<2x128xf32>
    %cst_11 = arith.constant dense<0.000000e+00> : vector<2xf32>
    %24 = vector.multi_reduction <add>, %23, %cst_11 [1] : vector<2x128xf32> to vector<2xf32>
    %25 = vector.shape_cast %24 : vector<2xf32> to vector<2x1xf32>
    %26 = vector.broadcast %25 : vector<2x1xf32> to vector<2x128xf32>
    %27 = arith.divf %23, %26 : vector<2x128xf32>
    %28 = arith.subf %8, %4 : vector<2x128xf32>
    %29 = math.absf %28 : vector<2x128xf32>
    %cst_12 = arith.constant 0.000000e+00 : f32
    %30 = vector.broadcast %cst_12 : f32 to vector<2x128xf32>
    %31 = arith.select %11, %29, %30 : vector<2x128xi1>, vector<2x128xf32>
    %cst_13 = arith.constant dense<0.000000e+00> : vector<2xf32>
    %32 = vector.multi_reduction <add>, %31, %cst_13 [1] : vector<2x128xf32> to vector<2xf32>
    %33 = vector.shape_cast %32 : vector<2xf32> to vector<2x1xf32>
    %cst_14 = arith.constant 0xFF800000 : f32
    %34 = vector.broadcast %cst_14 : f32 to vector<2x128xf32>
    %35 = arith.select %16, %27, %34 : vector<2x128xi1>, vector<2x128xf32>
    %cst_15 = arith.constant dense<0xFF800000> : vector<2xf32>
    %36 = vector.multi_reduction <maximumf>, %35, %cst_15 [1] : vector<2x128xf32> to vector<2xf32>
    %37 = vector.shape_cast %36 : vector<2xf32> to vector<2x1xf32>
    %38 = vector.broadcast %37 : vector<2x1xf32> to vector<2x128xf32>
    %39 = arith.subf %35, %38 : vector<2x128xf32>
    %40 = math.exp %39 : vector<2x128xf32>
    %cst_16 = arith.constant dense<0.000000e+00> : vector<2xf32>
    %41 = vector.multi_reduction <add>, %40, %cst_16 [1] : vector<2x128xf32> to vector<2xf32>
    %42 = vector.shape_cast %41 : vector<2xf32> to vector<2x1xf32>
    %43 = math.log %42 : vector<2x1xf32>
    %44 = arith.addf %37, %43 : vector<2x1xf32>
    %45 = vector.broadcast %44 : vector<2x1xf32> to vector<2x128xf32>
    %46 = arith.subf %27, %45 : vector<2x128xf32>
    %47 = vector.broadcast %3 : vector<1x128xf32> to vector<2x128xf32>
    %48 = arith.mulf %47, %4 : vector<2x128xf32>
    %49 = arith.mulf %48, %46 : vector<2x128xf32>
    %cst_17 = arith.constant dense<0.000000e+00> : vector<2xf32>
    %50 = vector.multi_reduction <add>, %49, %cst_17 [1] : vector<2x128xf32> to vector<2xf32>
    %51 = vector.shape_cast %50 : vector<2xf32> to vector<2x1xf32>
    %cst_18 = arith.constant 0.000000e+00 : f32
    %52 = vector.broadcast %cst_18 : f32 to vector<2x1xf32>
    %53 = arith.subf %52, %51 : vector<2x1xf32>
    %54 = arith.select %11, %8, %27 : vector<2x128xi1>, vector<2x128xf32>
    %c16_i32 = arith.constant 16 : i32
    %55 = vector.broadcast %c16_i32 : i32 to vector<2x128xi32>
    %56 = arith.cmpi eq, %9, %55 : vector<2x128xi32>
    %cst_19 = arith.constant 0.000000e+00 : f32
    %57 = vector.shape_cast %33 : vector<2x1xf32> to vector<2x1xf32>
    %58 = vector.broadcast %57 : vector<2x1xf32> to vector<2x128xf32>
    %59 = vector.broadcast %cst_19 : f32 to vector<2x128xf32>
    %60 = arith.select %56, %58, %59 : vector<2x128xi1>, vector<2x128xf32>
    %61 = arith.addf %54, %60 : vector<2x128xf32>
    %c17_i32 = arith.constant 17 : i32
    %62 = vector.broadcast %c17_i32 : i32 to vector<2x128xi32>
    %63 = arith.cmpi eq, %9, %62 : vector<2x128xi32>
    %cst_20 = arith.constant 0.000000e+00 : f32
    %64 = vector.shape_cast %53 : vector<2x1xf32> to vector<2x1xf32>
    %65 = vector.broadcast %64 : vector<2x1xf32> to vector<2x128xf32>
    %66 = vector.broadcast %cst_20 : f32 to vector<2x128xf32>
    %67 = arith.select %63, %65, %66 : vector<2x128xi1>, vector<2x128xf32>
    %68 = arith.addf %61, %67 : vector<2x128xf32>
    %c0_21 = arith.constant 0 : index
    %c0_22 = arith.constant 0 : index
    %69 = vector.load %arg5[%c0_21, %c0_22] : memref<2x128xf32, #tpu.memory_space<vmem>>, vector<2x128xf32>
    tpu.vector_store %arg5[%c0_21, %c0_22], %68 {strides = array<i32>} : memref<2x128xf32, #tpu.memory_space<vmem>>, vector<2x128xf32>,
    return
  }
  func.func @transform_0(%arg0: i32) -> (i32, i32, i32) {
    %c0_i32 = arith.constant 0 : i32
    %c0_i32_0 = arith.constant 0 : i32
    %c0_i32_1 = arith.constant 0 : i32
    return %arg0, %c0_i32, %c0_i32_0 : i32, i32, i32
  }
  func.func @transform_1(%arg0: i32) -> (i32, i32) {
    %c0_i32 = arith.constant 0 : i32
    %c0_i32_0 = arith.constant 0 : i32
    %c0_i32_1 = arith.constant 0 : i32
    return %c0_i32, %c0_i32_0 : i32, i32
  }
  func.func @transform_2(%arg0: i32) -> (i32, i32) {
    %c0_i32 = arith.constant 0 : i32
    %c0_i32_0 = arith.constant 0 : i32
    %c0_i32_1 = arith.constant 0 : i32
    return %c0_i32, %c0_i32_0 : i32, i32
  }
  func.func @transform_3(%arg0: i32) -> (i32, i32) {
    %c0_i32 = arith.constant 0 : i32
    %c0_i32_0 = arith.constant 0 : i32
    return %arg0, %c0_i32 : i32, i32
  }
  func.func @transform_4(%arg0: i32) -> (i32, i32) {
    %c0_i32 = arith.constant 0 : i32
    %c0_i32_0 = arith.constant 0 : i32
    return %arg0, %c0_i32 : i32, i32
  }
}

</mosaic_0001>

<llo_original>
// kernel: year_validator_forward.1
$region0: #{year_validator_forward.1}
  #allocation0 [shape = 'u32[]', space=smem, size = 0x4, offset = 0x4, fixed_abs, tag = 'smem constant byte address 0x4 - core index']
  #allocation1 [shape = 'u32[72,128]{1,0:T(1,128)}', space=vmem, size = 0x9000, scoped, tag = 'internal scratch']
  %s0 = inlined_call_operand.vmem [shape: f32[2,8,32], index: 0, kind: input, shape index: {}]
  %s1 = inlined_call_operand.vmem [shape: f32[32,128], index: 1, kind: input, shape index: {}]
  %s2 = inlined_call_operand.vmem [shape: f32[2,128], index: 2, kind: input, shape index: {}]
  %s3 = inlined_call_operand.vmem [shape: f32[2,128], index: 3, kind: input, shape index: {}]
  %s4 = inlined_call_operand.vmem [shape: f32[2,128], index: 4, kind: output, shape index: {}]
  %s5 = sld [smem:[#allocation0]]
  $region26: #{year_validator_forward.1} parent=0
    _
  %s7 = ssub.s32 1, %s5
  %s8 = scalar_select 0, %s7, %s5
  // Predicated region
  $region2: #{year_validator_forward.1} parent=0 // pred_check
    _
  $region3: #{year_validator_forward.1} parent=0 // pred_check_branch
    %10 = sbr.rel (0) target = $region5
  $region4: #{year_validator_forward.1} parent=0 // pred_region
    _
  $region5: #{year_validator_forward.1} parent=0 // pred_fallthru
    _
  // Predicated region
  $region6: #{year_validator_forward.1} parent=0 // pred_check
    _
  $region7: #{year_validator_forward.1} parent=0 // pred_check_branch
    %12 = sbr.rel (0) target = $region9
  $region8: #{year_validator_forward.1} parent=0 // pred_region
    _
  $region9: #{year_validator_forward.1} parent=0 // pred_fallthru
    _
  // Predicated region
  $region10: #{year_validator_forward.1} parent=0 // pred_check
    _
  $region11: #{year_validator_forward.1} parent=0 // pred_check_branch
    %14 = sbr.rel (0) target = $region13
  $region12: #{year_validator_forward.1} parent=0 // pred_region
    _
  $region13: #{year_validator_forward.1} parent=0 // pred_fallthru
    _
  // Predicated region
  $region14: #{year_validator_forward.1} parent=0 // pred_check
    _
  $region15: #{year_validator_forward.1} parent=0 // pred_check_branch
    %16 = sbr.rel (0) target = $region17
  $region16: #{year_validator_forward.1} parent=0 // pred_region
    _
  $region17: #{year_validator_forward.1} parent=0 // pred_fallthru
    _
  %v17 = vld [vmem:[%s0] sm:$0x1]
  %v18 = vld [vmem:[%s0 + $0x8] sm:$0x1]
  %v19 = vld [vmem:[%s2] sm:$0x1]
  %v20 = vld [vmem:[%s2 + $0x1] sm:$0x1]
  %v21 = vld [vmem:[%s3] sm:$0x3]
  %v22 = vld [vmem:[%s1] sm:$0xff]
  %v23 = vld [vmem:[%s1 + $0x8] sm:$0xff]
  %v24 = vld [vmem:[%s1 + $0x10] sm:$0xff]
  %v25 = vld [vmem:[%s1 + $0x18] sm:$0xff]
  %v26 = vperm.slane %v19, 0
  %v29 = vrot.slane %v18, 7
  %vm30 = vcmask 1041409
  %v31 = vsel %vm30, %v29, %v17
  %vm32 = vcmask 261120
  %v33 = vsel %vm32, %v31, 0
  %35 = vmatpush.msra.mxu0 0.0
  %36 = vmatpush.msra.mxu0 0.0
  %37 = vmatpush.msra.mxu0 0.0
  %38 = vmatpush.msra.mxu0 0.0
  %39 = vmatpush.msra.mxu0 0.0
  %40 = vmatpush.msra.mxu0 0.0
  %41 = vmatpush.msra.mxu0 0.0
  %42 = vmatpush.msra.mxu0 0.0
  %43 = vmatpush.msra.mxu0 0.0
  %44 = vmatpush.msra.mxu0 0.0
  %45 = vmatpush.msra.mxu0 0.0
  %46 = vmatpush.msra.mxu0 0.0
  %47 = vmatpush.msra.mxu0 %v25
  %48 = vmatpush.msra.mxu0 %v24
  %49 = vmatpush.msra.mxu0 %v23
  %50 = vmatpush.msra.mxu0 %v22
  %51 = vmatmul.f32.gmra.mxu0 %v33
  %v52 = vpop.f32.mrf.mxu0
  %v53 = vadd.f32 %v26, %v52
  %54 = vdwg.mxu0
  %v55 = vlaneseq
  %v56 = vand.u32 %v55, 127
  %vm57 = vcmp.eq.s32.totalorder %v56, 0
  %vm58 = vcmp.ge.s32.totalorder %v56, 1
  %vm59 = vcmp.lt.s32.totalorder %v56, 11
  %vm60 = vmand %vm58, %vm59
  %v61 = vsel %vm60, %v53, -inf
  %vm62 = vcmask 1041408
  %v63 = vsel %vm62, %v61, -inf
  %64 = vmax.xlane.f32.xlu0 %v63
  %v65 = vpop.xlane.xlu0 %64
  %v66 = vsub.f32 %v61, %v65
  %v67 = vmul.f32 %v66, 1.442695
  %v68 = vpow.pop %v67
  %v69 = vsel %vm62, %v68, 0.0
  %70 = vadd.xlane.f32.xlu0 %v69
  %v71 = vpop.xlane.xlu0 %70
  %v72 = vrcp.pop %v71
  %v73 = vmul.f32 %v71, %v72
  %v74 = vsub.f32 1.0, %v73
  %v75 = vmul.f32 %v72, %v74
  %v76 = vadd.f32 %v72, %v75
  %vm77 = vweird.f32 %v71
  %vm78 = vweird.f32 %v72
  %vm79 = vmor %vm77, %vm78
  %v80 = vsel %vm79, %v72, %v76
  %v81 = vand.u32 2147483647, %v71
  %vm82 = vcmp.eq.f32.partialorder %v81, 8.507059e+37
  %v83 = vand.u32 %v71, 2147483648
  %v84 = vor.u32 1.1754944e-38, %v83
  %v85 = vsel %vm82, %v84, %v80
  %v86 = vmul.f32 %v68, %v85
  %v87 = vsub.f32 %v53, %v21
  %v88 = vand.u32 2147483647, %v87
  %v89 = vsel %vm57, %v88, 0.0
  %v90 = vsel %vm62, %v89, 0.0
  %91 = vadd.xlane.f32.xlu0 %v90
  %v92 = vpop.xlane.xlu0 %91
  %v93 = vsel %vm60, %v86, -inf
  %v94 = vsel %vm62, %v93, -inf
  %95 = vmax.xlane.f32.xlu0 %v94
  %v96 = vpop.xlane.xlu0 %95
  %v97 = vsub.f32 %v93, %v96
  %v98 = vmul.f32 %v97, 1.442695
  %v99 = vpow.pop %v98
  %v100 = vsel %vm62, %v99, 0.0
  %101 = vadd.xlane.f32.xlu0 %v100
  %v102 = vpop.xlane.xlu0 %101
  %v103 = vlog2.pop %v102
  %v104 = vmul.f32 %v103, 0.6931472
  %v105 = vadd.f32 %v96, %v104
  %v106 = vsub.f32 %v86, %v105
  %v107 = vperm.slane %v20, 0
  %v108 = vmul.f32 %v107, %v21
  %v109 = vmul.f32 %v108, %v106
  %v110 = vsel %vm62, %v109, 0.0
  %111 = vadd.xlane.f32.xlu0 %v110
  %v112 = vpop.xlane.xlu0 %111
  %v113 = vsub.f32 0.0, %v112
  %v114 = vsel %vm57, %v53, %v86
  %vm115 = vcmp.eq.s32.totalorder %v56, 16
  %v116 = vsel %vm115, %v92, 0.0
  %v117 = vadd.f32 %v114, %v116
  %vm118 = vcmp.eq.s32.totalorder %v56, 17
  %v119 = vsel %vm118, %v113, 0.0
  %v120 = vadd.f32 %v117, %v119
  %121 = vst [vmem:[%s4] sm:$0x3] %v120
  // Predicated region
  $region18: #{year_validator_forward.1} parent=0 // pred_check
    _
  $region19: #{year_validator_forward.1} parent=0 // pred_check_branch
    %123 = sbr.rel (0) target = $region21
  $region20: #{year_validator_forward.1} parent=0 // pred_region
    _
  $region21: #{year_validator_forward.1} parent=0 // pred_fallthru
    _
  // Predicated region
  $region22: #{year_validator_forward.1} parent=0 // pred_check
    _
  $region23: #{year_validator_forward.1} parent=0 // pred_check_branch
    %125 = sbr.rel (0) target = $region25
  $region24: #{year_validator_forward.1} parent=0 // pred_region
    _
  $region25: #{year_validator_forward.1} parent=0 // pred_fallthru
    _

</llo_original>
